<compile_context>
chip_gen: v7x
topology: tpu7x:2x2x1
jax: 0.10.0
libtpu: 0.0.40
codegen_flags: <defaults>
</compile_context>

<pallas_src>
import functools

import jax
import jax.numpy as jnp
from jax import lax
from jax.experimental import pallas as pl
from jax.experimental.pallas import tpu as pltpu

LN_EPS = 1e-5      # torch.nn.LayerNorm default eps
NORM_EPS = 1e-12   # torch.nn.functional.normalize default eps
LANE = 128
SUBLANE = 8


def _round_up(x, m):
    return (x + m - 1) // m * m


def _vmem_limit_bytes():
    """Explicit scoped-VMEM limit (defaults 16/32 MiB are far below physical)."""
    try:
        cap = int(pltpu.get_tpu_info().vmem_capacity_bytes)
    except Exception:
        cap = 64 << 20          # conservative: v7x per-TC physical VMEM
    return min(cap * 3 // 4, 100 << 20)


def _choose_tiles(n, align, cap, min_tiles):
    """Split n into tiles: each tile a multiple of `align`, <= ~cap, aiming for
    >= min_tiles tiles (megacore) while minimizing padding waste.
    Returns (tile, n_padded, n_tiles) with tile * n_tiles == n_padded >= n."""
    n_al = _round_up(max(int(n), 1), align)
    if n_al <= align:
        return align, align, 1
    n_tiles = max(min_tiles, pl.cdiv(n_al, cap))
    tile = _round_up(pl.cdiv(n_al, n_tiles), align)
    n_tiles = pl.cdiv(n_al, tile)
    return tile, tile * n_tiles, n_tiles


# ----------------------------- kernel helpers ------------------------------ #

def _tower_forward(x, blob_ref, layout):
    """MLP tower: (Linear -> LayerNorm -> ReLU -> Dropout)*n -> Linear.

    `blob_ref` is one packed (rows, 128) f32 VMEM ref.  `layout` is a static
    tuple of (w_off, w_rows, v_off, d_out, has_ln) per layer; offsets are
    Python ints so all slices are static and 8-sublane aligned.
    """
    h = x
    for (w_off, w_rows, v_off, d_out, has_ln) in layout:
        w = blob_ref[pl.ds(w_off, w_rows), :]          # (128, 128) padded weight
        b = blob_ref[pl.ds(v_off, 1), :]               # (1, 128) padded bias
        h = jnp.dot(h, w, preferred_element_type=jnp.float32) + b
        if has_ln:
            gamma = blob_ref[pl.ds(v_off + 1, 1), :]
            beta = blob_ref[pl.ds(v_off + 2, 1), :]
            # Padded lanes of h are exactly zero, so full-lane sums equal the
            # logical-feature sums; normalize with the logical dim d_out.
            inv_d = 1.0 / float(d_out)
            s1 = jnp.sum(h, axis=-1, keepdims=True)
            s2 = jnp.sum(h * h, axis=-1, keepdims=True)
            mean = s1 * inv_d
            var = jnp.maximum(s2 * inv_d - mean * mean, 0.0)
            # gamma/beta are zero in padded lanes -> padding stays zero.
            h = (h - mean) * lax.rsqrt(var + LN_EPS) * gamma + beta
            h = jnp.maximum(h, 0.0)                    # ReLU
            # nn.Dropout: identity in eval / forward-inference mode.
    return h


def _l2_normalize_rows(x):
    """F.normalize(x, p=2, dim=1): x / max(||x||_2, eps) via rsqrt (EUP)."""
    nsq = jnp.sum(x * x, axis=-1, keepdims=True)
    return x * lax.rsqrt(jnp.maximum(nsq, NORM_EPS * NORM_EPS))


def _place_emb_kernel(place_layout, place_x_ref, place_blob_ref, p_emb_ref):
    """Place tower + L2 normalize, computed once per place tile (hoisted)."""
    p = _tower_forward(place_x_ref[...], place_blob_ref, place_layout)
    p_emb_ref[...] = _l2_normalize_rows(p)


def _user_sim_kernel(user_layout, inv_temp,
                     user_x_ref, user_blob_ref, p_emb_ref, out_ref, u_scratch):
    """User tower (once per user tile, cached in VMEM scratch) + similarity."""
    @pl.when(pl.program_id(1) == 0)
    def _():
        u = _tower_forward(user_x_ref[...], user_blob_ref, user_layout)
        u = _l2_normalize_rows(u)
        # Fold 1/temperature into u (tile_u x 128) instead of the big sim tile.
        u_scratch[...] = u * inv_temp

    # Contract last dims of both operands: no explicit transpose materialized.
    sim = lax.dot_general(u_scratch[...], p_emb_ref[...],
                          (((1,), (1,)), ((), ())),
                          preferred_element_type=jnp.float32)
    out_ref[...] = sim.astype(out_ref.dtype)


# --------------------------- parameter packing ------------------------------ #

def pack_tower_params(params, input_dim, hidden_layers, output_dim):
    """Pack a tower's logical params into one lane-dense (rows, 128) blob.

    Per layer layout in the blob:
      rows [off, off+128)        : weight, zero-padded to (128, 128)
      rows [off+128, off+136)    : row 0 = bias, row 1 = gamma, row 2 = beta
                                   (gamma/beta only for hidden layers),
                                   all zero-padded on the lane axis.
    Returns (blob, layout) where layout entries are static
    (w_off, w_rows, v_off, d_out, has_ln).
    """
    dims = []
    prev = input_dim
    for hdim in hidden_layers:
        dims.append((prev, hdim, True))
        prev = hdim
    dims.append((prev, output_dim, False))

    for d_in, d_out, _ in dims:
        assert d_in <= LANE and d_out <= LANE, (
            "packed layout assumes all layer dims <= 128")
        # TODO(synk): generalize packing to layer dims > 128 (tile weight rows).

    blocks, layout = [], []
    off = 0
    idx = 0
    for d_in, d_out, has_ln in dims:
        d_in_p = LANE  # activations are padded to 128 lanes everywhere
        w = params[idx]
        b = params[idx + 1]
        idx += 2
        w_blk = jnp.zeros((d_in_p, LANE), jnp.float32).at[:d_in, :d_out].set(w)
        v_blk = jnp.zeros((SUBLANE, LANE), jnp.float32)
        v_blk = v_blk.at[0, :d_out].set(b)
        if has_ln:
            g = params[idx]
            beta = params[idx + 1]
            idx += 2
            v_blk = v_blk.at[1, :d_out].set(g)
            v_blk = v_blk.at[2, :d_out].set(beta)
        blocks.append(w_blk)
        blocks.append(v_blk)
        layout.append((off, d_in_p, off + d_in_p, d_out, has_ln))
        off += d_in_p + SUBLANE
    return jnp.concatenate(blocks, axis=0), tuple(layout)


# ------------------------------- wrapper ----------------------------------- #

def two_tower_forward(user_features, place_features,
                      user_blob, user_layout, place_blob, place_layout,
                      temperature, *, user_tile=256, place_tile=2048,
                      out_dtype=jnp.float32):
    """Fused two-tower forward pass (two Pallas kernel calls)."""
    b_user, d_user = user_features.shape
    b_place, d_place = place_features.shape
    assert d_user <= LANE and d_place <= LANE

    # User tiles: sublane-aligned, >=2 tiles when possible (megacore on v7x),
    # sized from the batch so dead-row padding stays small.
    tile_u, b_user_p, n_ut = _choose_tiles(b_user, SUBLANE, user_tile, 2)
    # Place tiles: lane-dense (multiple of 128) output columns, bounded size
    # so the (tile_u, tile_p) output tile fits VMEM on every generation.
    tile_p, b_place_p, n_pt = _choose_tiles(b_place, LANE, place_tile, 1)

    ux = jnp.zeros((b_user_p, LANE), jnp.float32)
    ux = ux.at[:b_user, :d_user].set(user_features.astype(jnp.float32))
    px = jnp.zeros((b_place_p, LANE), jnp.float32)
    px = px.at[:b_place, :d_place].set(place_features.astype(jnp.float32))

    vmem_limit = _vmem_limit_bytes()

    # ---- Kernel A: place tower + L2-normalize, hoisted out of the user loop.
    place_kernel = functools.partial(_place_emb_kernel, place_layout)
    p_emb = pl.pallas_call(
        place_kernel,
        out_shape=jax.ShapeDtypeStruct((b_place_p, LANE), jnp.float32),
        grid_spec=pltpu.PrefetchScalarGridSpec(
            num_scalar_prefetch=0,
            grid=(n_pt,),
            in_specs=[
                pl.BlockSpec((tile_p, LANE), lambda i: (i, 0)),      # place tile
                pl.BlockSpec(place_blob.shape, lambda i: (0, 0)),    # packed params
            ],
            out_specs=pl.BlockSpec((tile_p, LANE), lambda i: (i, 0)),
        ),
        compiler_params=pltpu.CompilerParams(
            dimension_semantics=("parallel",),
            vmem_limit_bytes=vmem_limit),
    )(px, place_blob)

    # ---- Kernel B: user tower (cached per user tile) + tiled similarity.
    sim_kernel = functools.partial(_user_sim_kernel, user_layout,
                                   1.0 / float(temperature))
    out = pl.pallas_call(
        sim_kernel,
        out_shape=jax.ShapeDtypeStruct((b_user_p, b_place_p), out_dtype),
        grid_spec=pltpu.PrefetchScalarGridSpec(
            num_scalar_prefetch=0,
            grid=(n_ut, n_pt),
            in_specs=[
                pl.BlockSpec((tile_u, LANE), lambda i, j: (i, 0)),    # user tile
                pl.BlockSpec(user_blob.shape, lambda i, j: (0, 0)),   # packed params
                pl.BlockSpec((tile_p, LANE), lambda i, j: (j, 0)),    # place embeds
            ],
            out_specs=pl.BlockSpec((tile_u, tile_p), lambda i, j: (i, j)),
            scratch_shapes=[pltpu.VMEM((tile_u, LANE), jnp.float32)],
        ),
        compiler_params=pltpu.CompilerParams(
            dimension_semantics=("parallel", "arbitrary"),
            vmem_limit_bytes=vmem_limit),
    )(ux, user_blob, p_emb)

    return out[:b_user, :b_place]


# --------------------------- parameter creation ----------------------------- #

def init_tower_params(key, input_dim, hidden_layers, output_dim):
    """Deterministic init mimicking nn.Linear / nn.LayerNorm shapes.

    Returns a flat list of logical (unpadded) params:
      per hidden layer: W (in, out), b (out,), gamma (out,), beta (out,)
      final layer:      W (in, out), b (out,)
    """
    params = []
    prev = input_dim
    dims = list(hidden_layers) + [output_dim]
    for li, h in enumerate(dims):
        key, kw, kb = jax.random.split(key, 3)
        bound = 1.0 / (prev ** 0.5)
        w = jax.random.uniform(kw, (prev, h), jnp.float32, -bound, bound)
        b = jax.random.uniform(kb, (h,), jnp.float32, -bound, bound)
        params.append(w)
        params.append(b)
        if li < len(hidden_layers):
            params.append(jnp.ones((h,), jnp.float32))    # LayerNorm gamma
            params.append(jnp.zeros((h,), jnp.float32))   # LayerNorm beta
        prev = h
    return params


# -------------------------- pure-JAX reference ------------------------------ #

def _tower_ref(x, params):
    h = x
    n_hidden = (len(params) - 2) // 4
    idx = 0
    for _ in range(n_hidden):
        w, b, g, beta = params[idx:idx + 4]
        idx += 4
        h = h @ w + b
        mean = jnp.mean(h, axis=-1, keepdims=True)
        var = jnp.mean((h - mean) ** 2, axis=-1, keepdims=True)
        h = (h - mean) / jnp.sqrt(var + LN_EPS) * g + beta
        h = jnp.maximum(h, 0.0)
    w, b = params[idx], params[idx + 1]
    return h @ w + b


def two_tower_ref(user_x, place_x, user_params, place_params, temperature):
    u = _tower_ref(user_x, user_params)
    p = _tower_ref(place_x, place_params)
    u = u / jnp.maximum(jnp.linalg.norm(u, axis=1, keepdims=True), NORM_EPS)
    p = p / jnp.maximum(jnp.linalg.norm(p, axis=1, keepdims=True), NORM_EPS)
    return (u @ p.T) / temperature


# --------------------------------- main ------------------------------------- #

if __name__ == "__main__":
    batch = 8
    user_input_dim = 32
    place_input_dim = 24
    hidden_layers = [64, 32]
    output_dim = 16
    temperature = 0.1

    root = jax.random.PRNGKey(0)
    k_uw, k_pw, k_ux, k_px = jax.random.split(root, 4)

    user_params = init_tower_params(k_uw, user_input_dim, hidden_layers, output_dim)
    place_params = init_tower_params(k_pw, place_input_dim, hidden_layers, output_dim)

    user_blob, user_layout = pack_tower_params(
        user_params, user_input_dim, hidden_layers, output_dim)
    place_blob, place_layout = pack_tower_params(
        place_params, place_input_dim, hidden_layers, output_dim)

    user_features = jax.random.normal(k_ux, (batch, user_input_dim), jnp.float32)
    place_features = jax.random.normal(k_px, (batch, place_input_dim), jnp.float32)

    sim = two_tower_forward(user_features, place_features,
                            user_blob, user_layout, place_blob, place_layout,
                            temperature)
    sim = jax.block_until_ready(sim)

    ref = two_tower_ref(user_features, place_features,
                        user_params, place_params, temperature)

    assert sim.shape == (batch, batch)
    assert jnp.allclose(sim, ref, atol=1e-4, rtol=1e-4), (
        f"max abs err = {jnp.max(jnp.abs(sim - ref))}")

    print("KERNEL_OK")
</pallas_src>

<mosaic_0001>
module attributes {stable_mosaic.version = 11 : i64} {
  func.func @_place_emb_kernel(%arg0: i32, %arg1: memref<128x128xf32, #tpu.memory_space<vmem>>, %arg2: memref<408x128xf32, #tpu.memory_space<vmem>>, %arg3: memref<128x128xf32, #tpu.memory_space<vmem>>) attributes {dimension_semantics = [#tpu.dimension_semantics<parallel>], iteration_bounds = array<i64: 1>, scalar_prefetch = 0 : i64, scratch_operands = 0 : i64, tpu.core_type = #tpu.core_type<tc>, window_params = [{transform_indices = @transform_0, window_bounds = array<i64: 128, 128>}, {pipeline_mode = #tpu.pipeline_mode<synchronous>, transform_indices = @transform_1, window_bounds = array<i64: 408, 128>}, {transform_indices = @transform_2, window_bounds = array<i64: 128, 128>}]} {
    %c0 = arith.constant 0 : index
    %c0_0 = arith.constant 0 : index
    %0 = vector.load %arg1[%c0, %c0_0] : memref<128x128xf32, #tpu.memory_space<vmem>>, vector<128x128xf32>
    %c0_1 = arith.constant 0 : index
    %c0_2 = arith.constant 0 : index
    %1 = vector.load %arg2[%c0_1, %c0_2] : memref<408x128xf32, #tpu.memory_space<vmem>>, vector<128x128xf32>
    %c128 = arith.constant 128 : index
    %c0_3 = arith.constant 0 : index
    %2 = vector.load %arg2[%c128, %c0_3] : memref<408x128xf32, #tpu.memory_space<vmem>>, vector<1x128xf32>
    %cst = arith.constant dense<0.000000e+00> : vector<128x128xf32>
    %3 = tpu.matmul %0, %1, %cst {dimension_numbers = #tpu.dot_dimension_numbers<[1], [0], [0], [1], [0, 0, 1, 1], [], []>} : vector<128x128xf32>, vector<128x128xf32>, vector<128x128xf32> -> vector<128x128xf32>
    %4 = vector.broadcast %2 : vector<1x128xf32> to vector<128x128xf32>
    %5 = arith.addf %3, %4 : vector<128x128xf32>
    %c129 = arith.constant 129 : index
    %c0_4 = arith.constant 0 : index
    %6 = vector.load %arg2[%c129, %c0_4] : memref<408x128xf32, #tpu.memory_space<vmem>>, vector<1x128xf32>
    %c130 = arith.constant 130 : index
    %c0_5 = arith.constant 0 : index
    %7 = vector.load %arg2[%c130, %c0_5] : memref<408x128xf32, #tpu.memory_space<vmem>>, vector<1x128xf32>
    %cst_6 = arith.constant dense<0.000000e+00> : vector<128xf32>
    %8 = vector.multi_reduction <add>, %5, %cst_6 [1] : vector<128x128xf32> to vector<128xf32>
    %9 = vector.shape_cast %8 : vector<128xf32> to vector<128x1xf32>
    %10 = arith.mulf %5, %5 : vector<128x128xf32>
    %cst_7 = arith.constant dense<0.000000e+00> : vector<128xf32>
    %11 = vector.multi_reduction <add>, %10, %cst_7 [1] : vector<128x128xf32> to vector<128xf32>
    %12 = vector.shape_cast %11 : vector<128xf32> to vector<128x1xf32>
    %cst_8 = arith.constant 1.562500e-02 : f32
    %13 = vector.broadcast %cst_8 : f32 to vector<128x1xf32>
    %14 = arith.mulf %9, %13 : vector<128x1xf32>
    %cst_9 = arith.constant 1.562500e-02 : f32
    %15 = vector.broadcast %cst_9 : f32 to vector<128x1xf32>
    %16 = arith.mulf %12, %15 : vector<128x1xf32>
    %17 = arith.mulf %14, %14 : vector<128x1xf32>
    %18 = arith.subf %16, %17 : vector<128x1xf32>
    %cst_10 = arith.constant 0.000000e+00 : f32
    %19 = vector.broadcast %cst_10 : f32 to vector<128x1xf32>
    %20 = arith.maximumf %18, %19 : vector<128x1xf32>
    %21 = vector.broadcast %14 : vector<128x1xf32> to vector<128x128xf32>
    %22 = arith.subf %5, %21 : vector<128x128xf32>
    %cst_11 = arith.constant 9.99999974E-6 : f32
    %23 = vector.broadcast %cst_11 : f32 to vector<128x1xf32>
    %24 = arith.addf %20, %23 : vector<128x1xf32>
    %25 = math.rsqrt %24 : vector<128x1xf32>
    %26 = vector.broadcast %25 : vector<128x1xf32> to vector<128x128xf32>
    %27 = arith.mulf %22, %26 : vector<128x128xf32>
    %28 = vector.broadcast %6 : vector<1x128xf32> to vector<128x128xf32>
    %29 = arith.mulf %27, %28 : vector<128x128xf32>
    %30 = vector.broadcast %7 : vector<1x128xf32> to vector<128x128xf32>
    %31 = arith.addf %29, %30 : vector<128x128xf32>
    %cst_12 = arith.constant 0.000000e+00 : f32
    %32 = vector.broadcast %cst_12 : f32 to vector<128x128xf32>
    %33 = arith.maximumf %31, %32 : vector<128x128xf32>
    %c136 = arith.constant 136 : index
    %c0_13 = arith.constant 0 : index
    %34 = vector.load %arg2[%c136, %c0_13] : memref<408x128xf32, #tpu.memory_space<vmem>>, vector<128x128xf32>
    %c264 = arith.constant 264 : index
    %c0_14 = arith.constant 0 : index
    %35 = vector.load %arg2[%c264, %c0_14] : memref<408x128xf32, #tpu.memory_space<vmem>>, vector<1x128xf32>
    %cst_15 = arith.constant dense<0.000000e+00> : vector<128x128xf32>
    %36 = tpu.matmul %33, %34, %cst_15 {dimension_numbers = #tpu.dot_dimension_numbers<[1], [0], [0], [1], [0, 0, 1, 1], [], []>} : vector<128x128xf32>, vector<128x128xf32>, vector<128x128xf32> -> vector<128x128xf32>
    %37 = vector.broadcast %35 : vector<1x128xf32> to vector<128x128xf32>
    %38 = arith.addf %36, %37 : vector<128x128xf32>
    %c265 = arith.constant 265 : index
    %c0_16 = arith.constant 0 : index
    %39 = vector.load %arg2[%c265, %c0_16] : memref<408x128xf32, #tpu.memory_space<vmem>>, vector<1x128xf32>
    %c266 = arith.constant 266 : index
    %c0_17 = arith.constant 0 : index
    %40 = vector.load %arg2[%c266, %c0_17] : memref<408x128xf32, #tpu.memory_space<vmem>>, vector<1x128xf32>
    %cst_18 = arith.constant dense<0.000000e+00> : vector<128xf32>
    %41 = vector.multi_reduction <add>, %38, %cst_18 [1] : vector<128x128xf32> to vector<128xf32>
    %42 = vector.shape_cast %41 : vector<128xf32> to vector<128x1xf32>
    %43 = arith.mulf %38, %38 : vector<128x128xf32>
    %cst_19 = arith.constant dense<0.000000e+00> : vector<128xf32>
    %44 = vector.multi_reduction <add>, %43, %cst_19 [1] : vector<128x128xf32> to vector<128xf32>
    %45 = vector.shape_cast %44 : vector<128xf32> to vector<128x1xf32>
    %cst_20 = arith.constant 3.125000e-02 : f32
    %46 = vector.broadcast %cst_20 : f32 to vector<128x1xf32>
    %47 = arith.mulf %42, %46 : vector<128x1xf32>
    %cst_21 = arith.constant 3.125000e-02 : f32
    %48 = vector.broadcast %cst_21 : f32 to vector<128x1xf32>
    %49 = arith.mulf %45, %48 : vector<128x1xf32>
    %50 = arith.mulf %47, %47 : vector<128x1xf32>
    %51 = arith.subf %49, %50 : vector<128x1xf32>
    %cst_22 = arith.constant 0.000000e+00 : f32
    %52 = vector.broadcast %cst_22 : f32 to vector<128x1xf32>
    %53 = arith.maximumf %51, %52 : vector<128x1xf32>
    %54 = vector.broadcast %47 : vector<128x1xf32> to vector<128x128xf32>
    %55 = arith.subf %38, %54 : vector<128x128xf32>
    %cst_23 = arith.constant 9.99999974E-6 : f32
    %56 = vector.broadcast %cst_23 : f32 to vector<128x1xf32>
    %57 = arith.addf %53, %56 : vector<128x1xf32>
    %58 = math.rsqrt %57 : vector<128x1xf32>
    %59 = vector.broadcast %58 : vector<128x1xf32> to vector<128x128xf32>
    %60 = arith.mulf %55, %59 : vector<128x128xf32>
    %61 = vector.broadcast %39 : vector<1x128xf32> to vector<128x128xf32>
    %62 = arith.mulf %60, %61 : vector<128x128xf32>
    %63 = vector.broadcast %40 : vector<1x128xf32> to vector<128x128xf32>
    %64 = arith.addf %62, %63 : vector<128x128xf32>
    %cst_24 = arith.constant 0.000000e+00 : f32
    %65 = vector.broadcast %cst_24 : f32 to vector<128x128xf32>
    %66 = arith.maximumf %64, %65 : vector<128x128xf32>
    %c272 = arith.constant 272 : index
    %c0_25 = arith.constant 0 : index
    %67 = vector.load %arg2[%c272, %c0_25] : memref<408x128xf32, #tpu.memory_space<vmem>>, vector<128x128xf32>
    %c400 = arith.constant 400 : index
    %c0_26 = arith.constant 0 : index
    %68 = vector.load %arg2[%c400, %c0_26] : memref<408x128xf32, #tpu.memory_space<vmem>>, vector<1x128xf32>
    %cst_27 = arith.constant dense<0.000000e+00> : vector<128x128xf32>
    %69 = tpu.matmul %66, %67, %cst_27 {dimension_numbers = #tpu.dot_dimension_numbers<[1], [0], [0], [1], [0, 0, 1, 1], [], []>} : vector<128x128xf32>, vector<128x128xf32>, vector<128x128xf32> -> vector<128x128xf32>
    %70 = vector.broadcast %68 : vector<1x128xf32> to vector<128x128xf32>
    %71 = arith.addf %69, %70 : vector<128x128xf32>
    %72 = arith.mulf %71, %71 : vector<128x128xf32>
    %cst_28 = arith.constant dense<0.000000e+00> : vector<128xf32>
    %73 = vector.multi_reduction <add>, %72, %cst_28 [1] : vector<128x128xf32> to vector<128xf32>
    %74 = vector.shape_cast %73 : vector<128xf32> to vector<128x1xf32>
    %cst_29 = arith.constant 1.000000e-24 : f32
    %75 = vector.broadcast %cst_29 : f32 to vector<128x1xf32>
    %76 = arith.maximumf %74, %75 : vector<128x1xf32>
    %77 = math.rsqrt %76 : vector<128x1xf32>
    %78 = vector.broadcast %77 : vector<128x1xf32> to vector<128x128xf32>
    %79 = arith.mulf %71, %78 : vector<128x128xf32>
    %c0_30 = arith.constant 0 : index
    %c0_31 = arith.constant 0 : index
    %80 = vector.load %arg3[%c0_30, %c0_31] : memref<128x128xf32, #tpu.memory_space<vmem>>, vector<128x128xf32>
    tpu.vector_store %arg3[%c0_30, %c0_31], %79 {strides = array<i32>} : memref<128x128xf32, #tpu.memory_space<vmem>>, vector<128x128xf32>,
    return
  }
  func.func @transform_0(%arg0: i32) -> (i32, i32) {
    %c0_i32 = arith.constant 0 : i32
    %c0_i32_0 = arith.constant 0 : i32
    return %arg0, %c0_i32 : i32, i32
  }
  func.func @transform_1(%arg0: i32) -> (i32, i32) {
    %c0_i32 = arith.constant 0 : i32
    %c0_i32_0 = arith.constant 0 : i32
    %c0_i32_1 = arith.constant 0 : i32
    return %c0_i32, %c0_i32_0 : i32, i32
  }
  func.func @transform_2(%arg0: i32) -> (i32, i32) {
    %c0_i32 = arith.constant 0 : i32
    %c0_i32_0 = arith.constant 0 : i32
    return %arg0, %c0_i32 : i32, i32
  }
}

</mosaic_0001>

<llo_original>
// kernel: tpu_custom_call.1
$region0: #{tpu_custom_call.1}
  #allocation0 [shape = 'u32[]', space=smem, size = 0x4, offset = 0x4, fixed_abs, tag = 'smem constant byte address 0x4 - core index']
  #allocation1 [shape = 'u32[144,128]{1,0:T(1,128)}', space=vmem, size = 0x12000, scoped, tag = 'internal scratch']
  %s0 = inlined_call_operand.hbm [shape: f32[128,128], index: 0, kind: input, shape index: {}]
  %s1 = inlined_call_operand.hbm [shape: f32[408,128], index: 1, kind: input, shape index: {}]
  %s2 = inlined_call_operand.hbm [shape: f32[128,128], index: 2, kind: output, shape index: {}]
  %s3 = sld [smem:[#allocation0]]
  $region26: #{tpu_custom_call.1} parent=0
    _
  %s5 = ssub.s32 1, %s3
  %s6 = scalar_select 0, %s5, %s3
  $region1: #{tpu_custom_call.1} parent=0
    #allocation2 [shape = 'u8[65536]{0}', space=vmem, size = 0x10000, scoped, tag = 'input window, operand 0, single buffered']
    #allocation3 [shape = 's32[1]{0}', space=sflag, size = 0x4, scoped, tag = 'scoped memory for tpu_custom_call.1']
    #allocation4 [shape = 's32[1]{0}', space=sflag, size = 0x4, scoped, tag = 'scoped memory for tpu_custom_call.1']
    #allocation5 [shape = 'u8[208896]{0}', space=vmem, size = 0x33000, scoped, tag = 'input window, operand 1, single buffered']
    #allocation6 [shape = 's32[1]{0}', space=sflag, size = 0x4, scoped, tag = 'scoped memory for tpu_custom_call.1']
    #allocation7 [shape = 'u8[65536]{0}', space=vmem, size = 0x10000, scoped, tag = 'output window, operand 0, single buffered']
    %7 = vsyncpa [#allocation3], 0
    %8 = vsyncpa [#allocation6], 0
    %9 = vsyncpa [#allocation4], 0
    // Predicated region
    $region2: #{tpu_custom_call.1} parent=1 // pred_check
      _
    $region3: #{tpu_custom_call.1} parent=1 // pred_check_branch
      %11 = sbr.rel (0) target = $region5
    $region4: #{tpu_custom_call.1} parent=1 // pred_region
      %s13 = ssub.s32 2048, 2048
      %14 = vsyncadd [#allocation3], %s13
      %s15 = sshll.u32 [#allocation2], 4
      %s16 = int_to_ptr.vmem [resolvable:$true] %s15
      %21 = dma.hbm_to_vmem [thread:$0]  %s0, 2048, %s16, [#allocation3], 128, 128, 8
    $region5: #{tpu_custom_call.1} parent=1 // pred_fallthru
      _
    // Predicated region
    $region6: #{tpu_custom_call.1} parent=1 // pred_check
      _
    $region7: #{tpu_custom_call.1} parent=1 // pred_check_branch
      %23 = sbr.rel (0) target = $region9
    $region8: #{tpu_custom_call.1} parent=1 // pred_region
      %s25 = ssub.s32 6528, 6528
      %26 = vsyncadd [#allocation6], %s25
      %s27 = sshll.u32 [#allocation5], 4
      %s28 = int_to_ptr.vmem [resolvable:$true] %s27
      %33 = dma.hbm_to_vmem [thread:$0]  %s1, 6528, %s28, [#allocation6], 128, 128, 8
    $region9: #{tpu_custom_call.1} parent=1 // pred_fallthru
      _
    // Predicated region
    $region10: #{tpu_custom_call.1} parent=1 // pred_check
      _
    $region11: #{tpu_custom_call.1} parent=1 // pred_check_branch
      %35 = sbr.rel (0) target = $region13
    $region12: #{tpu_custom_call.1} parent=1 // pred_region
      %36 = dma.done [#allocation3], 2048
    $region13: #{tpu_custom_call.1} parent=1 // pred_fallthru
      _
    // Predicated region
    $region14: #{tpu_custom_call.1} parent=1 // pred_check
      _
    $region15: #{tpu_custom_call.1} parent=1 // pred_check_branch
      %38 = sbr.rel (0) target = $region17
    $region16: #{tpu_custom_call.1} parent=1 // pred_region
      %39 = dma.done [#allocation6], 6528
    $region17: #{tpu_custom_call.1} parent=1 // pred_fallthru
      _
    %v40 = vld [vmem:[#allocation2] sm:$0xff]
    %v41 = vld [vmem:[#allocation2 + $0x8] sm:$0xff]
    %v42 = vld [vmem:[#allocation2 + $0x10] sm:$0xff]
    %v43 = vld [vmem:[#allocation2 + $0x18] sm:$0xff]
    %v44 = vld [vmem:[#allocation2 + $0x20] sm:$0xff]
    %v45 = vld [vmem:[#allocation2 + $0x28] sm:$0xff]
    %v46 = vld [vmem:[#allocation2 + $0x30] sm:$0xff]
    %v47 = vld [vmem:[#allocation2 + $0x38] sm:$0xff]
    %v48 = vld [vmem:[#allocation2 + $0x40] sm:$0xff]
    %v49 = vld [vmem:[#allocation2 + $0x48] sm:$0xff]
    %v50 = vld [vmem:[#allocation2 + $0x50] sm:$0xff]
    %v51 = vld [vmem:[#allocation2 + $0x58] sm:$0xff]
    %v52 = vld [vmem:[#allocation2 + $0x60] sm:$0xff]
    %v53 = vld [vmem:[#allocation2 + $0x68] sm:$0xff]
    %v54 = vld [vmem:[#allocation2 + $0x70] sm:$0xff]
    %v55 = vld [vmem:[#allocation2 + $0x78] sm:$0xff]
    %v56 = vld [vmem:[#allocation5] sm:$0xff]
    %v57 = vld [vmem:[#allocation5 + $0x8] sm:$0xff]
    %v58 = vld [vmem:[#allocation5 + $0x10] sm:$0xff]
    %v59 = vld [vmem:[#allocation5 + $0x18] sm:$0xff]
    %v60 = vld [vmem:[#allocation5 + $0x20] sm:$0xff]
    %v61 = vld [vmem:[#allocation5 + $0x28] sm:$0xff]
    %v62 = vld [vmem:[#allocation5 + $0x30] sm:$0xff]
    %v63 = vld [vmem:[#allocation5 + $0x38] sm:$0xff]
    %v64 = vld [vmem:[#allocation5 + $0x40] sm:$0xff]
    %v65 = vld [vmem:[#allocation5 + $0x48] sm:$0xff]
    %v66 = vld [vmem:[#allocation5 + $0x50] sm:$0xff]
    %v67 = vld [vmem:[#allocation5 + $0x58] sm:$0xff]
    %v68 = vld [vmem:[#allocation5 + $0x60] sm:$0xff]
    %v69 = vld [vmem:[#allocation5 + $0x68] sm:$0xff]
    %v70 = vld [vmem:[#allocation5 + $0x70] sm:$0xff]
    %v71 = vld [vmem:[#allocation5 + $0x78] sm:$0xff]
    %v72 = vld [vmem:[#allocation5 + $0x80] sm:$0x1]
    %v73 = vlaneseq
    %v74 = vshrl.u32 %v73, 7
    %v75 = vsub.s32 0, %v74
    %v76 = vrot.slane %v72, %v75
    %77 = vmatprep.subr.mxu0 0.0
    %78 = vmatpush1.msra.mxu0 %v56
    %79 = vmatprep.subr.mxu0 0.0
    %80 = vmatpush1.msra.mxu0 %v57
    %81 = vmatprep.subr.mxu0 0.0
    %82 = vmatpush1.msra.mxu0 %v58
    %83 = vmatprep.subr.mxu0 0.0
    %84 = vmatpush1.msra.mxu0 %v59
    %85 = vmatprep.subr.mxu0 0.0
    %86 = vmatpush1.msra.mxu0 %v60
    %87 = vmatprep.subr.mxu0 0.0
    %88 = vmatpush1.msra.mxu0 %v61
    %89 = vmatprep.subr.mxu0 0.0
    %90 = vmatpush1.msra.mxu0 %v62
    %91 = vmatprep.subr.mxu0 0.0
    %92 = vmatpush1.msra.mxu0 %v63
    %93 = vmatprep.subr.mxu0 0.0
    %94 = vmatpush1.msra.mxu0 %v64
    %95 = vmatprep.subr.mxu0 0.0
    %96 = vmatpush1.msra.mxu0 %v65
    %97 = vmatprep.subr.mxu0 0.0
    %98 = vmatpush1.msra.mxu0 %v66
    %99 = vmatprep.subr.mxu0 0.0
    %100 = vmatpush1.msra.mxu0 %v67
    %101 = vmatprep.subr.mxu0 0.0
    %102 = vmatpush1.msra.mxu0 %v68
    %103 = vmatprep.subr.mxu0 0.0
    %104 = vmatpush1.msra.mxu0 %v69
    %105 = vmatprep.subr.mxu0 0.0
    %106 = vmatpush1.msra.mxu0 %v70
    %107 = vmatprep.subr.mxu0 0.0
    %108 = vmatpush1.msra.mxu0 %v71
    %109 = vmatprep.subr.mxu0 0.0
    %110 = vmatpush1.msra.mxu0 0.0
    %111 = vmatprep.subr.mxu0 0.0
    %112 = vmatpush1.msra.mxu0 0.0
    %113 = vmatprep.subr.mxu0 0.0
    %114 = vmatpush1.msra.mxu0 0.0
    %115 = vmatprep.subr.mxu0 0.0
    %116 = vmatpush1.msra.mxu0 0.0
    %117 = vmatprep.subr.mxu0 0.0
    %118 = vmatpush1.msra.mxu0 0.0
    %119 = vmatprep.subr.mxu0 0.0
    %120 = vmatpush1.msra.mxu0 0.0
    %121 = vmatprep.subr.mxu0 0.0
    %122 = vmatpush1.msra.mxu0 0.0
    %123 = vmatprep.subr.mxu0 0.0
    %124 = vmatpush1.msra.mxu0 0.0
    %125 = vmatprep.subr.mxu0 0.0
    %126 = vmatpush1.msra.mxu0 0.0
    %127 = vmatprep.subr.mxu0 0.0
    %128 = vmatpush1.msra.mxu0 0.0
    %129 = vmatprep.subr.mxu0 0.0
    %130 = vmatpush1.msra.mxu0 0.0
    %131 = vmatprep.subr.mxu0 0.0
    %132 = vmatpush1.msra.mxu0 0.0
    %133 = vmatprep.subr.mxu0 0.0
    %134 = vmatpush1.msra.mxu0 0.0
    %135 = vmatprep.subr.mxu0 0.0
    %136 = vmatpush1.msra.mxu0 0.0
    %137 = vmatprep.subr.mxu0 0.0
    %138 = vmatpush1.msra.mxu0 0.0
    %139 = vmatprep.subr.mxu0 0.0
    %140 = vmatpush1.msra.mxu0 0.0
    %141 = vmatprep.mubr.f32.mxu0 0.0
    %142 = vmatmul.mubr.f32.gmra.mrb[0].mxu0 %v40
    %v143 = vpop.f32.mrb[0].mxu0
    %v144 = vadd.f32 %v76, %v143
    %v145 = vpop.f32.mrb[0].mxu0
    %146 = vmatprep.mubr.f32.mxu0 0.0
    %147 = vmatmul.mubr.f32.gmra.mrb[0].mxu0 %v41
    %v148 = vpop.f32.mrb[0].mxu0
    %v149 = vadd.f32 %v76, %v148
    %v150 = vpop.f32.mrb[0].mxu0
    %151 = vmatprep.mubr.f32.mxu0 0.0
    %152 = vmatmul.mubr.f32.gmra.mrb[0].mxu0 %v42
    %v153 = vpop.f32.mrb[0].mxu0
    %v154 = vadd.f32 %v76, %v153
    %v155 = vpop.f32.mrb[0].mxu0
    %156 = vmatprep.mubr.f32.mxu0 0.0
    %157 = vmatmul.mubr.f32.gmra.mrb[0].mxu0 %v43
    %v158 = vpop.f32.mrb[0].mxu0
    %v159 = vadd.f32 %v76, %v158
    %v160 = vpop.f32.mrb[0].mxu0
    %161 = vmatprep.mubr.f32.mxu0 0.0
    %162 = vmatmul.mubr.f32.gmra.mrb[0].mxu0 %v44
    %v163 = vpop.f32.mrb[0].mxu0
    %v164 = vadd.f32 %v76, %v163
    %v165 = vpop.f32.mrb[0].mxu0
    %166 = vmatprep.mubr.f32.mxu0 0.0
    %167 = vmatmul.mubr.f32.gmra.mrb[0].mxu0 %v45
    %v168 = vpop.f32.mrb[0].mxu0
    %v169 = vadd.f32 %v76, %v168
    %v170 = vpop.f32.mrb[0].mxu0
    %171 = vmatprep.mubr.f32.mxu0 0.0
    %172 = vmatmul.mubr.f32.gmra.mrb[0].mxu0 %v46
    %v173 = vpop.f32.mrb[0].mxu0
    %v174 = vadd.f32 %v76, %v173
    %v175 = vpop.f32.mrb[0].mxu0
    %176 = vmatprep.mubr.f32.mxu0 0.0
    %177 = vmatmul.mubr.f32.gmra.mrb[0].mxu0 %v47
    %v178 = vpop.f32.mrb[0].mxu0
    %v179 = vadd.f32 %v76, %v178
    %v180 = vpop.f32.mrb[0].mxu0
    %181 = vmatprep.mubr.f32.mxu0 0.0
    %182 = vmatmul.mubr.f32.gmra.mrb[0].mxu0 %v48
    %v183 = vpop.f32.mrb[0].mxu0
    %v184 = vadd.f32 %v76, %v183
    %v185 = vpop.f32.mrb[0].mxu0
    %186 = vmatprep.mubr.f32.mxu0 0.0
    %187 = vmatmul.mubr.f32.gmra.mrb[0].mxu0 %v49
    %v188 = vpop.f32.mrb[0].mxu0
    %v189 = vadd.f32 %v76, %v188
    %v190 = vpop.f32.mrb[0].mxu0
    %191 = vmatprep.mubr.f32.mxu0 0.0
    %192 = vmatmul.mubr.f32.gmra.mrb[0].mxu0 %v50
    %v193 = vpop.f32.mrb[0].mxu0
    %v194 = vadd.f32 %v76, %v193
    %v195 = vpop.f32.mrb[0].mxu0
    %196 = vmatprep.mubr.f32.mxu0 0.0
    %197 = vmatmul.mubr.f32.gmra.mrb[0].mxu0 %v51
    %v198 = vpop.f32.mrb[0].mxu0
    %v199 = vadd.f32 %v76, %v198
    %v200 = vpop.f32.mrb[0].mxu0
    %201 = vmatprep.mubr.f32.mxu0 0.0
    %202 = vmatmul.mubr.f32.gmra.mrb[0].mxu0 %v52
    %v203 = vpop.f32.mrb[0].mxu0
    %v204 = vadd.f32 %v76, %v203
    %v205 = vpop.f32.mrb[0].mxu0
    %206 = vmatprep.mubr.f32.mxu0 0.0
    %207 = vmatmul.mubr.f32.gmra.mrb[0].mxu0 %v53
    %v208 = vpop.f32.mrb[0].mxu0
    %v209 = vadd.f32 %v76, %v208
    %v210 = vpop.f32.mrb[0].mxu0
    %211 = vmatprep.mubr.f32.mxu0 0.0
    %212 = vmatmul.mubr.f32.gmra.mrb[0].mxu0 %v54
    %v213 = vpop.f32.mrb[0].mxu0
    %v214 = vadd.f32 %v76, %v213
    %v215 = vpop.f32.mrb[0].mxu0
    %216 = vmatprep.mubr.f32.mxu0 0.0
    %217 = vmatmul.mubr.f32.gmra.mrb[0].mxu0 %v55
    %v218 = vpop.f32.mrb[0].mxu0
    %v219 = vadd.f32 %v76, %v218
    %v220 = vpop.f32.mrb[0].mxu0
    %221 = vdwg.mxu0
    %v222 = vld [vmem:[#allocation5 + $0x81] sm:$0x1]
    %v223 = vld [vmem:[#allocation5 + $0x82] sm:$0x1]
    %224 = vadd.xlane.f32.xlu0 %v144
    %v225 = vpop.xlane.xlu0 %224
    %226 = vadd.xlane.f32.xlu0 %v149
    %v227 = vpop.xlane.xlu0 %226
    %228 = vadd.xlane.f32.xlu0 %v154
    %v229 = vpop.xlane.xlu0 %228
    %230 = vadd.xlane.f32.xlu0 %v159
    %v231 = vpop.xlane.xlu0 %230
    %232 = vadd.xlane.f32.xlu0 %v164
    %v233 = vpop.xlane.xlu0 %232
    %234 = vadd.xlane.f32.xlu0 %v169
    %v235 = vpop.xlane.xlu0 %234
    %236 = vadd.xlane.f32.xlu0 %v174
    %v237 = vpop.xlane.xlu0 %236
    %238 = vadd.xlane.f32.xlu0 %v179
    %v239 = vpop.xlane.xlu0 %238
    %240 = vadd.xlane.f32.xlu0 %v184
    %v241 = vpop.xlane.xlu0 %240
    %242 = vadd.xlane.f32.xlu0 %v189
    %v243 = vpop.xlane.xlu0 %242
    %244 = vadd.xlane.f32.xlu0 %v194
    %v245 = vpop.xlane.xlu0 %244
    %246 = vadd.xlane.f32.xlu0 %v199
    %v247 = vpop.xlane.xlu0 %246
    %248 = vadd.xlane.f32.xlu0 %v204
    %v249 = vpop.xlane.xlu0 %248
    %250 = vadd.xlane.f32.xlu0 %v209
    %v251 = vpop.xlane.xlu0 %250
    %252 = vadd.xlane.f32.xlu0 %v214
    %v253 = vpop.xlane.xlu0 %252
    %254 = vadd.xlane.f32.xlu0 %v219
    %v255 = vpop.xlane.xlu0 %254
    %v256 = vmul.f32 %v144, %v144
    %v257 = vmul.f32 %v149, %v149
    %v258 = vmul.f32 %v154, %v154
    %v259 = vmul.f32 %v159, %v159
    %v260 = vmul.f32 %v164, %v164
    %v261 = vmul.f32 %v169, %v169
    %v262 = vmul.f32 %v174, %v174
    %v263 = vmul.f32 %v179, %v179
    %v264 = vmul.f32 %v184, %v184
    %v265 = vmul.f32 %v189, %v189
    %v266 = vmul.f32 %v194, %v194
    %v267 = vmul.f32 %v199, %v199
    %v268 = vmul.f32 %v204, %v204
    %v269 = vmul.f32 %v209, %v209
    %v270 = vmul.f32 %v214, %v214
    %v271 = vmul.f32 %v219, %v219
    %272 = vadd.xlane.f32.xlu0 %v256
    %v273 = vpop.xlane.xlu0 %272
    %274 = vadd.xlane.f32.xlu0 %v257
    %v275 = vpop.xlane.xlu0 %274
    %276 = vadd.xlane.f32.xlu0 %v258
    %v277 = vpop.xlane.xlu0 %276
    %278 = vadd.xlane.f32.xlu0 %v259
    %v279 = vpop.xlane.xlu0 %278
    %280 = vadd.xlane.f32.xlu0 %v260
    %v281 = vpop.xlane.xlu0 %280
    %282 = vadd.xlane.f32.xlu0 %v261
    %v283 = vpop.xlane.xlu0 %282
    %284 = vadd.xlane.f32.xlu0 %v262
    %v285 = vpop.xlane.xlu0 %284
    %286 = vadd.xlane.f32.xlu0 %v263
    %v287 = vpop.xlane.xlu0 %286
    %288 = vadd.xlane.f32.xlu0 %v264
    %v289 = vpop.xlane.xlu0 %288
    %290 = vadd.xlane.f32.xlu0 %v265
    %v291 = vpop.xlane.xlu0 %290
    %292 = vadd.xlane.f32.xlu0 %v266
    %v293 = vpop.xlane.xlu0 %292
    %294 = vadd.xlane.f32.xlu0 %v267
    %v295 = vpop.xlane.xlu0 %294
    %296 = vadd.xlane.f32.xlu0 %v268
    %v297 = vpop.xlane.xlu0 %296
    %298 = vadd.xlane.f32.xlu0 %v269
    %v299 = vpop.xlane.xlu0 %298
    %300 = vadd.xlane.f32.xlu0 %v270
    %v301 = vpop.xlane.xlu0 %300
    %302 = vadd.xlane.f32.xlu0 %v271
    %v303 = vpop.xlane.xlu0 %302
    %v304 = vmul.f32 %v225, 0.015625
    %v305 = vmul.f32 %v227, 0.015625
    %v306 = vmul.f32 %v229, 0.015625
    %v307 = vmul.f32 %v231, 0.015625
    %v308 = vmul.f32 %v233, 0.015625
    %v309 = vmul.f32 %v235, 0.015625
    %v310 = vmul.f32 %v237, 0.015625
    %v311 = vmul.f32 %v239, 0.015625
    %v312 = vmul.f32 %v241, 0.015625
    %v313 = vmul.f32 %v243, 0.015625
    %v314 = vmul.f32 %v245, 0.015625
    %v315 = vmul.f32 %v247, 0.015625
    %v316 = vmul.f32 %v249, 0.015625
    %v317 = vmul.f32 %v251, 0.015625
    %v318 = vmul.f32 %v253, 0.015625
    %v319 = vmul.f32 %v255, 0.015625
    %v320 = vmul.f32 %v273, 0.015625
    %v321 = vmul.f32 %v275, 0.015625
    %v322 = vmul.f32 %v277, 0.015625
    %v323 = vmul.f32 %v279, 0.015625
    %v324 = vmul.f32 %v281, 0.015625
    %v325 = vmul.f32 %v283, 0.015625
    %v326 = vmul.f32 %v285, 0.015625
    %v327 = vmul.f32 %v287, 0.015625
    %v328 = vmul.f32 %v289, 0.015625
    %v329 = vmul.f32 %v291, 0.015625
    %v330 = vmul.f32 %v293, 0.015625
    %v331 = vmul.f32 %v295, 0.015625
    %v332 = vmul.f32 %v297, 0.015625
    %v333 = vmul.f32 %v299, 0.015625
    %v334 = vmul.f32 %v301, 0.015625
    %v335 = vmul.f32 %v303, 0.015625
    %v336 = vmul.f32 %v304, %v304
    %v337 = vmul.f32 %v305, %v305
    %v338 = vmul.f32 %v306, %v306
    %v339 = vmul.f32 %v307, %v307
    %v340 = vmul.f32 %v308, %v308
    %v341 = vmul.f32 %v309, %v309
    %v342 = vmul.f32 %v310, %v310
    %v343 = vmul.f32 %v311, %v311
    %v344 = vmul.f32 %v312, %v312
    %v345 = vmul.f32 %v313, %v313
    %v346 = vmul.f32 %v314, %v314
    %v347 = vmul.f32 %v315, %v315
    %v348 = vmul.f32 %v316, %v316
    %v349 = vmul.f32 %v317, %v317
    %v350 = vmul.f32 %v318, %v318
    %v351 = vmul.f32 %v319, %v319
    %v352 = vsub.f32 %v320, %v336
    %v353 = vsub.f32 %v321, %v337
    %v354 = vsub.f32 %v322, %v338
    %v355 = vsub.f32 %v323, %v339
    %v356 = vsub.f32 %v324, %v340
    %v357 = vsub.f32 %v325, %v341
    %v358 = vsub.f32 %v326, %v342
    %v359 = vsub.f32 %v327, %v343
    %v360 = vsub.f32 %v328, %v344
    %v361 = vsub.f32 %v329, %v345
    %v362 = vsub.f32 %v330, %v346
    %v363 = vsub.f32 %v331, %v347
    %v364 = vsub.f32 %v332, %v348
    %v365 = vsub.f32 %v333, %v349
    %v366 = vsub.f32 %v334, %v350
    %v367 = vsub.f32 %v335, %v351
    %v368 = vmax.f32 %v352, 0.0
    %v369 = vmax.f32 %v353, 0.0
    %v370 = vmax.f32 %v354, 0.0
    %v371 = vmax.f32 %v355, 0.0
    %v372 = vmax.f32 %v356, 0.0
    %v373 = vmax.f32 %v357, 0.0
    %v374 = vmax.f32 %v358, 0.0
    %v375 = vmax.f32 %v359, 0.0
    %v376 = vmax.f32 %v360, 0.0
    %v377 = vmax.f32 %v361, 0.0
    %v378 = vmax.f32 %v362, 0.0
    %v379 = vmax.f32 %v363, 0.0
    %v380 = vmax.f32 %v364, 0.0
    %v381 = vmax.f32 %v365, 0.0
    %v382 = vmax.f32 %v366, 0.0
    %v383 = vmax.f32 %v367, 0.0
    %v384 = vsub.f32 %v144, %v304
    %v385 = vsub.f32 %v149, %v305
    %v386 = vsub.f32 %v154, %v306
    %v387 = vsub.f32 %v159, %v307
    %v388 = vsub.f32 %v164, %v308
    %v389 = vsub.f32 %v169, %v309
    %v390 = vsub.f32 %v174, %v310
    %v391 = vsub.f32 %v179, %v311
    %v392 = vsub.f32 %v184, %v312
    %v393 = vsub.f32 %v189, %v313
    %v394 = vsub.f32 %v194, %v314
    %v395 = vsub.f32 %v199, %v315
    %v396 = vsub.f32 %v204, %v316
    %v397 = vsub.f32 %v209, %v317
    %v398 = vsub.f32 %v214, %v318
    %v399 = vsub.f32 %v219, %v319
    %v400 = vadd.f32 %v368, 1e-05
    %v401 = vadd.f32 %v369, 1e-05
    %v402 = vadd.f32 %v370, 1e-05
    %v403 = vadd.f32 %v371, 1e-05
    %v404 = vadd.f32 %v372, 1e-05
    %v405 = vadd.f32 %v373, 1e-05
    %v406 = vadd.f32 %v374, 1e-05
    %v407 = vadd.f32 %v375, 1e-05
    %v408 = vadd.f32 %v376, 1e-05
    %v409 = vadd.f32 %v377, 1e-05
    %v410 = vadd.f32 %v378, 1e-05
    %v411 = vadd.f32 %v379, 1e-05
    %v412 = vadd.f32 %v380, 1e-05
    %v413 = vadd.f32 %v381, 1e-05
    %v414 = vadd.f32 %v382, 1e-05
    %v415 = vadd.f32 %v383, 1e-05
    %v416 = vrsqrt.pop %v400
    %v417 = vrsqrt.pop %v401
    %v418 = vrsqrt.pop %v402
    %v419 = vrsqrt.pop %v403
    %v420 = vrsqrt.pop %v404
    %v421 = vrsqrt.pop %v405
    %v422 = vrsqrt.pop %v406
    %v423 = vrsqrt.pop %v407
    %v424 = vrsqrt.pop %v408
    %v425 = vrsqrt.pop %v409
    %v426 = vrsqrt.pop %v410
    %v427 = vrsqrt.pop %v411
    %v428 = vrsqrt.pop %v412
    %v429 = vrsqrt.pop %v413
    %v430 = vrsqrt.pop %v414
    %v431 = vrsqrt.pop %v415
    %v432 = vmul.f32 %v384, %v416
    %v433 = vmul.f32 %v385, %v417
    %v434 = vmul.f32 %v386, %v418
    %v435 = vmul.f32 %v387, %v419
    %v436 = vmul.f32 %v388, %v420
    %v437 = vmul.f32 %v389, %v421
    %v438 = vmul.f32 %v390, %v422
    %v439 = vmul.f32 %v391, %v423
    %v440 = vmul.f32 %v392, %v424
    %v441 = vmul.f32 %v393, %v425
    %v442 = vmul.f32 %v394, %v426
    %v443 = vmul.f32 %v395, %v427
    %v444 = vmul.f32 %v396, %v428
    %v445 = vmul.f32 %v397, %v429
    %v446 = vmul.f32 %v398, %v430
    %v447 = vmul.f32 %v399, %v431
    %v448 = vlaneseq
    %v449 = vshrl.u32 %v448, 7
    %v450 = vsub.s32 0, %v449
    %v451 = vrot.slane %v222, %v450
    %v452 = vmul.f32 %v432, %v451
    %v453 = vmul.f32 %v433, %v451
    %v454 = vmul.f32 %v434, %v451
    %v455 = vmul.f32 %v435, %v451
    %v456 = vmul.f32 %v436, %v451
    %v457 = vmul.f32 %v437, %v451
    %v458 = vmul.f32 %v438, %v451
    %v459 = vmul.f32 %v439, %v451
    %v460 = vmul.f32 %v440, %v451
    %v461 = vmul.f32 %v441, %v451
    %v462 = vmul.f32 %v442, %v451
    %v463 = vmul.f32 %v443, %v451
    %v464 = vmul.f32 %v444, %v451
    %v465 = vmul.f32 %v445, %v451
    %v466 = vmul.f32 %v446, %v451
    %v467 = vmul.f32 %v447, %v451
    %v468 = vlaneseq
    %v469 = vshrl.u32 %v468, 7
    %v470 = vsub.s32 0, %v469
    %v471 = vrot.slane %v223, %v470
    %v472 = vadd.f32 %v452, %v471
    %v473 = vadd.f32 %v453, %v471
    %v474 = vadd.f32 %v454, %v471
    %v475 = vadd.f32 %v455, %v471
    %v476 = vadd.f32 %v456, %v471
    %v477 = vadd.f32 %v457, %v471
    %v478 = vadd.f32 %v458, %v471
    %v479 = vadd.f32 %v459, %v471
    %v480 = vadd.f32 %v460, %v471
    %v481 = vadd.f32 %v461, %v471
    %v482 = vadd.f32 %v462, %v471
    %v483 = vadd.f32 %v463, %v471
    %v484 = vadd.f32 %v464, %v471
    %v485 = vadd.f32 %v465, %v471
    %v486 = vadd.f32 %v466, %v471
    %v487 = vadd.f32 %v467, %v471
    %v488 = vmax.f32 %v472, 0.0
    %v489 = vmax.f32 %v473, 0.0
    %v490 = vmax.f32 %v474, 0.0
    %v491 = vmax.f32 %v475, 0.0
    %v492 = vmax.f32 %v476, 0.0
    %v493 = vmax.f32 %v477, 0.0
    %v494 = vmax.f32 %v478, 0.0
    %v495 = vmax.f32 %v479, 0.0
    %v496 = vmax.f32 %v480, 0.0
    %v497 = vmax.f32 %v481, 0.0
    %v498 = vmax.f32 %v482, 0.0
    %v499 = vmax.f32 %v483, 0.0
    %v500 = vmax.f32 %v484, 0.0
    %v501 = vmax.f32 %v485, 0.0
    %v502 = vmax.f32 %v486, 0.0
    %v503 = vmax.f32 %v487, 0.0
    %v504 = vld [vmem:[#allocation5 + $0x88] sm:$0xff]
    %v505 = vld [vmem:[#allocation5 + $0x90] sm:$0xff]
    %v506 = vld [vmem:[#allocation5 + $0x98] sm:$0xff]
    %v507 = vld [vmem:[#allocation5 + $0xa0] sm:$0xff]
    %v508 = vld [vmem:[#allocation5 + $0xa8] sm:$0xff]
    %v509 = vld [vmem:[#allocation5 + $0xb0] sm:$0xff]
    %v510 = vld [vmem:[#allocation5 + $0xb8] sm:$0xff]
    %v511 = vld [vmem:[#allocation5 + $0xc0] sm:$0xff]
    %v512 = vld [vmem:[#allocation5 + $0xc8] sm:$0xff]
    %v513 = vld [vmem:[#allocation5 + $0xd0] sm:$0xff]
    %v514 = vld [vmem:[#allocation5 + $0xd8] sm:$0xff]
    %v515 = vld [vmem:[#allocation5 + $0xe0] sm:$0xff]
    %v516 = vld [vmem:[#allocation5 + $0xe8] sm:$0xff]
    %v517 = vld [vmem:[#allocation5 + $0xf0] sm:$0xff]
    %v518 = vld [vmem:[#allocation5 + $0xf8] sm:$0xff]
    %v519 = vld [vmem:[#allocation5 + $0x100] sm:$0xff]
    %v520 = vld [vmem:[#allocation5 + $0x108] sm:$0x1]
    %v521 = vlaneseq
    %v522 = vshrl.u32 %v521, 7
    %v523 = vsub.s32 0, %v522
    %v524 = vrot.slane %v520, %v523
    %525 = vmatprep.subr.mxu0 0.0
    %526 = vmatpush1.msra.mxu0 %v504
    %527 = vmatprep.subr.mxu0 0.0
    %528 = vmatpush1.msra.mxu0 %v505
    %529 = vmatprep.subr.mxu0 0.0
    %530 = vmatpush1.msra.mxu0 %v506
    %531 = vmatprep.subr.mxu0 0.0
    %532 = vmatpush1.msra.mxu0 %v507
    %533 = vmatprep.subr.mxu0 0.0
    %534 = vmatpush1.msra.mxu0 %v508
    %535 = vmatprep.subr.mxu0 0.0
    %536 = vmatpush1.msra.mxu0 %v509
    %537 = vmatprep.subr.mxu0 0.0
    %538 = vmatpush1.msra.mxu0 %v510
    %539 = vmatprep.subr.mxu0 0.0
    %540 = vmatpush1.msra.mxu0 %v511
    %541 = vmatprep.subr.mxu0 0.0
    %542 = vmatpush1.msra.mxu0 %v512
    %543 = vmatprep.subr.mxu0 0.0
    %544 = vmatpush1.msra.mxu0 %v513
    %545 = vmatprep.subr.mxu0 0.0
    %546 = vmatpush1.msra.mxu0 %v514
    %547 = vmatprep.subr.mxu0 0.0
    %548 = vmatpush1.msra.mxu0 %v515
    %549 = vmatprep.subr.mxu0 0.0
    %550 = vmatpush1.msra.mxu0 %v516
    %551 = vmatprep.subr.mxu0 0.0
    %552 = vmatpush1.msra.mxu0 %v517
    %553 = vmatprep.subr.mxu0 0.0
    %554 = vmatpush1.msra.mxu0 %v518
    %555 = vmatprep.subr.mxu0 0.0
    %556 = vmatpush1.msra.mxu0 %v519
    %557 = vmatprep.subr.mxu0 0.0
    %558 = vmatpush1.msra.mxu0 0.0
    %559 = vmatprep.subr.mxu0 0.0
    %560 = vmatpush1.msra.mxu0 0.0
    %561 = vmatprep.subr.mxu0 0.0
    %562 = vmatpush1.msra.mxu0 0.0
    %563 = vmatprep.subr.mxu0 0.0
    %564 = vmatpush1.msra.mxu0 0.0
    %565 = vmatprep.subr.mxu0 0.0
    %566 = vmatpush1.msra.mxu0 0.0
    %567 = vmatprep.subr.mxu0 0.0
    %568 = vmatpush1.msra.mxu0 0.0
    %569 = vmatprep.subr.mxu0 0.0
    %570 = vmatpush1.msra.mxu0 0.0
    %571 = vmatprep.subr.mxu0 0.0
    %572 = vmatpush1.msra.mxu0 0.0
    %573 = vmatprep.subr.mxu0 0.0
    %574 = vmatpush1.msra.mxu0 0.0
    %575 = vmatprep.subr.mxu0 0.0
    %576 = vmatpush1.msra.mxu0 0.0
    %577 = vmatprep.subr.mxu0 0.0
    %578 = vmatpush1.msra.mxu0 0.0
    %579 = vmatprep.subr.mxu0 0.0
    %580 = vmatpush1.msra.mxu0 0.0
    %581 = vmatprep.subr.mxu0 0.0
    %582 = vmatpush1.msra.mxu0 0.0
    %583 = vmatprep.subr.mxu0 0.0
    %584 = vmatpush1.msra.mxu0 0.0
    %585 = vmatprep.subr.mxu0 0.0
    %586 = vmatpush1.msra.mxu0 0.0
    %587 = vmatprep.subr.mxu0 0.0
    %588 = vmatpush1.msra.mxu0 0.0
    %589 = vmatprep.mubr.f32.mxu0 0.0
    %590 = vmatmul.mubr.f32.gmra.mrb[0].mxu0 %v488
    %v591 = vpop.f32.mrb[0].mxu0
    %v592 = vadd.f32 %v524, %v591
    %v593 = vpop.f32.mrb[0].mxu0
    %594 = vmatprep.mubr.f32.mxu0 0.0
    %595 = vmatmul.mubr.f32.gmra.mrb[0].mxu0 %v489
    %v596 = vpop.f32.mrb[0].mxu0
    %v597 = vadd.f32 %v524, %v596
    %v598 = vpop.f32.mrb[0].mxu0
    %599 = vmatprep.mubr.f32.mxu0 0.0
    %600 = vmatmul.mubr.f32.gmra.mrb[0].mxu0 %v490
    %v601 = vpop.f32.mrb[0].mxu0
    %v602 = vadd.f32 %v524, %v601
    %v603 = vpop.f32.mrb[0].mxu0
    %604 = vmatprep.mubr.f32.mxu0 0.0
    %605 = vmatmul.mubr.f32.gmra.mrb[0].mxu0 %v491
    %v606 = vpop.f32.mrb[0].mxu0
    %v607 = vadd.f32 %v524, %v606
    %v608 = vpop.f32.mrb[0].mxu0
    %609 = vmatprep.mubr.f32.mxu0 0.0
    %610 = vmatmul.mubr.f32.gmra.mrb[0].mxu0 %v492
    %v611 = vpop.f32.mrb[0].mxu0
    %v612 = vadd.f32 %v524, %v611
    %v613 = vpop.f32.mrb[0].mxu0
    %614 = vmatprep.mubr.f32.mxu0 0.0
    %615 = vmatmul.mubr.f32.gmra.mrb[0].mxu0 %v493
    %v616 = vpop.f32.mrb[0].mxu0
    %v617 = vadd.f32 %v524, %v616
    %v618 = vpop.f32.mrb[0].mxu0
    %619 = vmatprep.mubr.f32.mxu0 0.0
    %620 = vmatmul.mubr.f32.gmra.mrb[0].mxu0 %v494
    %v621 = vpop.f32.mrb[0].mxu0
    %v622 = vadd.f32 %v524, %v621
    %v623 = vpop.f32.mrb[0].mxu0
    %624 = vmatprep.mubr.f32.mxu0 0.0
    %625 = vmatmul.mubr.f32.gmra.mrb[0].mxu0 %v495
    %v626 = vpop.f32.mrb[0].mxu0
    %v627 = vadd.f32 %v524, %v626
    %v628 = vpop.f32.mrb[0].mxu0
    %629 = vmatprep.mubr.f32.mxu0 0.0
    %630 = vmatmul.mubr.f32.gmra.mrb[0].mxu0 %v496
    %v631 = vpop.f32.mrb[0].mxu0
    %v632 = vadd.f32 %v524, %v631
    %v633 = vpop.f32.mrb[0].mxu0
    %634 = vmatprep.mubr.f32.mxu0 0.0
    %635 = vmatmul.mubr.f32.gmra.mrb[0].mxu0 %v497
    %v636 = vpop.f32.mrb[0].mxu0
    %v637 = vadd.f32 %v524, %v636
    %v638 = vpop.f32.mrb[0].mxu0
    %639 = vmatprep.mubr.f32.mxu0 0.0
    %640 = vmatmul.mubr.f32.gmra.mrb[0].mxu0 %v498
    %v641 = vpop.f32.mrb[0].mxu0
    %v642 = vadd.f32 %v524, %v641
    %v643 = vpop.f32.mrb[0].mxu0
    %644 = vmatprep.mubr.f32.mxu0 0.0
    %645 = vmatmul.mubr.f32.gmra.mrb[0].mxu0 %v499
    %v646 = vpop.f32.mrb[0].mxu0
    %v647 = vadd.f32 %v524, %v646
    %v648 = vpop.f32.mrb[0].mxu0
    %649 = vmatprep.mubr.f32.mxu0 0.0
    %650 = vmatmul.mubr.f32.gmra.mrb[0].mxu0 %v500
    %v651 = vpop.f32.mrb[0].mxu0
    %v652 = vadd.f32 %v524, %v651
    %v653 = vpop.f32.mrb[0].mxu0
    %654 = vmatprep.mubr.f32.mxu0 0.0
    %655 = vmatmul.mubr.f32.gmra.mrb[0].mxu0 %v501
    %v656 = vpop.f32.mrb[0].mxu0
    %v657 = vadd.f32 %v524, %v656
    %v658 = vpop.f32.mrb[0].mxu0
    %659 = vmatprep.mubr.f32.mxu0 0.0
    %660 = vmatmul.mubr.f32.gmra.mrb[0].mxu0 %v502
    %v661 = vpop.f32.mrb[0].mxu0
    %v662 = vadd.f32 %v524, %v661
    %v663 = vpop.f32.mrb[0].mxu0
    %664 = vmatprep.mubr.f32.mxu0 0.0
    %665 = vmatmul.mubr.f32.gmra.mrb[0].mxu0 %v503
    %v666 = vpop.f32.mrb[0].mxu0
    %v667 = vadd.f32 %v524, %v666
    %v668 = vpop.f32.mrb[0].mxu0
    %669 = vdwg.mxu0
    %v670 = vld [vmem:[#allocation5 + $0x109] sm:$0x1]
    %v671 = vld [vmem:[#allocation5 + $0x10a] sm:$0x1]
    %672 = vadd.xlane.f32.xlu0 %v592
    %v673 = vpop.xlane.xlu0 %672
    %674 = vadd.xlane.f32.xlu0 %v597
    %v675 = vpop.xlane.xlu0 %674
    %676 = vadd.xlane.f32.xlu0 %v602
    %v677 = vpop.xlane.xlu0 %676
    %678 = vadd.xlane.f32.xlu0 %v607
    %v679 = vpop.xlane.xlu0 %678
    %680 = vadd.xlane.f32.xlu0 %v612
    %v681 = vpop.xlane.xlu0 %680
    %682 = vadd.xlane.f32.xlu0 %v617
    %v683 = vpop.xlane.xlu0 %682
    %684 = vadd.xlane.f32.xlu0 %v622
    %v685 = vpop.xlane.xlu0 %684
    %686 = vadd.xlane.f32.xlu0 %v627
    %v687 = vpop.xlane.xlu0 %686
    %688 = vadd.xlane.f32.xlu0 %v632
    %v689 = vpop.xlane.xlu0 %688
    %690 = vadd.xlane.f32.xlu0 %v637
    %v691 = vpop.xlane.xlu0 %690
    %692 = vadd.xlane.f32.xlu0 %v642
    %v693 = vpop.xlane.xlu0 %692
    %694 = vadd.xlane.f32.xlu0 %v647
    %v695 = vpop.xlane.xlu0 %694
    %696 = vadd.xlane.f32.xlu0 %v652
    %v697 = vpop.xlane.xlu0 %696
    %698 = vadd.xlane.f32.xlu0 %v657
    %v699 = vpop.xlane.xlu0 %698
    %700 = vadd.xlane.f32.xlu0 %v662
    %v701 = vpop.xlane.xlu0 %700
    %702 = vadd.xlane.f32.xlu0 %v667
    %v703 = vpop.xlane.xlu0 %702
    %v704 = vmul.f32 %v592, %v592
    %v705 = vmul.f32 %v597, %v597
    %v706 = vmul.f32 %v602, %v602
    %v707 = vmul.f32 %v607, %v607
    %v708 = vmul.f32 %v612, %v612
    %v709 = vmul.f32 %v617, %v617
    %v710 = vmul.f32 %v622, %v622
    %v711 = vmul.f32 %v627, %v627
    %v712 = vmul.f32 %v632, %v632
    %v713 = vmul.f32 %v637, %v637
    %v714 = vmul.f32 %v642, %v642
    %v715 = vmul.f32 %v647, %v647
    %v716 = vmul.f32 %v652, %v652
    %v717 = vmul.f32 %v657, %v657
    %v718 = vmul.f32 %v662, %v662
    %v719 = vmul.f32 %v667, %v667
    %720 = vadd.xlane.f32.xlu0 %v704
    %v721 = vpop.xlane.xlu0 %720
    %722 = vadd.xlane.f32.xlu0 %v705
    %v723 = vpop.xlane.xlu0 %722
    %724 = vadd.xlane.f32.xlu0 %v706
    %v725 = vpop.xlane.xlu0 %724
    %726 = vadd.xlane.f32.xlu0 %v707
    %v727 = vpop.xlane.xlu0 %726
    %728 = vadd.xlane.f32.xlu0 %v708
    %v729 = vpop.xlane.xlu0 %728
    %730 = vadd.xlane.f32.xlu0 %v709
    %v731 = vpop.xlane.xlu0 %730
    %732 = vadd.xlane.f32.xlu0 %v710
    %v733 = vpop.xlane.xlu0 %732
    %734 = vadd.xlane.f32.xlu0 %v711
    %v735 = vpop.xlane.xlu0 %734
    %736 = vadd.xlane.f32.xlu0 %v712
    %v737 = vpop.xlane.xlu0 %736
    %738 = vadd.xlane.f32.xlu0 %v713
    %v739 = vpop.xlane.xlu0 %738
    %740 = vadd.xlane.f32.xlu0 %v714
    %v741 = vpop.xlane.xlu0 %740
    %742 = vadd.xlane.f32.xlu0 %v715
    %v743 = vpop.xlane.xlu0 %742
    %744 = vadd.xlane.f32.xlu0 %v716
    %v745 = vpop.xlane.xlu0 %744
    %746 = vadd.xlane.f32.xlu0 %v717
    %v747 = vpop.xlane.xlu0 %746
    %748 = vadd.xlane.f32.xlu0 %v718
    %v749 = vpop.xlane.xlu0 %748
    %750 = vadd.xlane.f32.xlu0 %v719
    %v751 = vpop.xlane.xlu0 %750
    %v752 = vmul.f32 %v673, 0.03125
    %v753 = vmul.f32 %v675, 0.03125
    %v754 = vmul.f32 %v677, 0.03125
    %v755 = vmul.f32 %v679, 0.03125
    %v756 = vmul.f32 %v681, 0.03125
    %v757 = vmul.f32 %v683, 0.03125
    %v758 = vmul.f32 %v685, 0.03125
    %v759 = vmul.f32 %v687, 0.03125
    %v760 = vmul.f32 %v689, 0.03125
    %v761 = vmul.f32 %v691, 0.03125
    %v762 = vmul.f32 %v693, 0.03125
    %v763 = vmul.f32 %v695, 0.03125
    %v764 = vmul.f32 %v697, 0.03125
    %v765 = vmul.f32 %v699, 0.03125
    %v766 = vmul.f32 %v701, 0.03125
    %v767 = vmul.f32 %v703, 0.03125
    %v768 = vmul.f32 %v721, 0.03125
    %v769 = vmul.f32 %v723, 0.03125
    %v770 = vmul.f32 %v725, 0.03125
    %v771 = vmul.f32 %v727, 0.03125
    %v772 = vmul.f32 %v729, 0.03125
    %v773 = vmul.f32 %v731, 0.03125
    %v774 = vmul.f32 %v733, 0.03125
    %v775 = vmul.f32 %v735, 0.03125
    %v776 = vmul.f32 %v737, 0.03125
    %v777 = vmul.f32 %v739, 0.03125
    %v778 = vmul.f32 %v741, 0.03125
    %v779 = vmul.f32 %v743, 0.03125
    %v780 = vmul.f32 %v745, 0.03125
    %v781 = vmul.f32 %v747, 0.03125
    %v782 = vmul.f32 %v749, 0.03125
    %v783 = vmul.f32 %v751, 0.03125
    %v784 = vmul.f32 %v752, %v752
    %v785 = vmul.f32 %v753, %v753
    %v786 = vmul.f32 %v754, %v754
    %v787 = vmul.f32 %v755, %v755
    %v788 = vmul.f32 %v756, %v756
    %v789 = vmul.f32 %v757, %v757
    %v790 = vmul.f32 %v758, %v758
    %v791 = vmul.f32 %v759, %v759
    %v792 = vmul.f32 %v760, %v760
    %v793 = vmul.f32 %v761, %v761
    %v794 = vmul.f32 %v762, %v762
    %v795 = vmul.f32 %v763, %v763
    %v796 = vmul.f32 %v764, %v764
    %v797 = vmul.f32 %v765, %v765
    %v798 = vmul.f32 %v766, %v766
    %v799 = vmul.f32 %v767, %v767
    %v800 = vsub.f32 %v768, %v784
    %v801 = vsub.f32 %v769, %v785
    %v802 = vsub.f32 %v770, %v786
    %v803 = vsub.f32 %v771, %v787
    %v804 = vsub.f32 %v772, %v788
    %v805 = vsub.f32 %v773, %v789
    %v806 = vsub.f32 %v774, %v790
    %v807 = vsub.f32 %v775, %v791
    %v808 = vsub.f32 %v776, %v792
    %v809 = vsub.f32 %v777, %v793
    %v810 = vsub.f32 %v778, %v794
    %v811 = vsub.f32 %v779, %v795
    %v812 = vsub.f32 %v780, %v796
    %v813 = vsub.f32 %v781, %v797
    %v814 = vsub.f32 %v782, %v798
    %v815 = vsub.f32 %v783, %v799
    %v816 = vmax.f32 %v800, 0.0
    %v817 = vmax.f32 %v801, 0.0
    %v818 = vmax.f32 %v802, 0.0
    %v819 = vmax.f32 %v803, 0.0
    %v820 = vmax.f32 %v804, 0.0
    %v821 = vmax.f32 %v805, 0.0
    %v822 = vmax.f32 %v806, 0.0
    %v823 = vmax.f32 %v807, 0.0
    %v824 = vmax.f32 %v808, 0.0
    %v825 = vmax.f32 %v809, 0.0
    %v826 = vmax.f32 %v810, 0.0
    %v827 = vmax.f32 %v811, 0.0
    %v828 = vmax.f32 %v812, 0.0
    %v829 = vmax.f32 %v813, 0.0
    %v830 = vmax.f32 %v814, 0.0
    %v831 = vmax.f32 %v815, 0.0
    %v832 = vsub.f32 %v592, %v752
    %v833 = vsub.f32 %v597, %v753
    %v834 = vsub.f32 %v602, %v754
    %v835 = vsub.f32 %v607, %v755
    %v836 = vsub.f32 %v612, %v756
    %v837 = vsub.f32 %v617, %v757
    %v838 = vsub.f32 %v622, %v758
    %v839 = vsub.f32 %v627, %v759
    %v840 = vsub.f32 %v632, %v760
    %v841 = vsub.f32 %v637, %v761
    %v842 = vsub.f32 %v642, %v762
    %v843 = vsub.f32 %v647, %v763
    %v844 = vsub.f32 %v652, %v764
    %v845 = vsub.f32 %v657, %v765
    %v846 = vsub.f32 %v662, %v766
    %v847 = vsub.f32 %v667, %v767
    %v848 = vadd.f32 %v816, 1e-05
    %v849 = vadd.f32 %v817, 1e-05
    %v850 = vadd.f32 %v818, 1e-05
    %v851 = vadd.f32 %v819, 1e-05
    %v852 = vadd.f32 %v820, 1e-05
    %v853 = vadd.f32 %v821, 1e-05
    %v854 = vadd.f32 %v822, 1e-05
    %v855 = vadd.f32 %v823, 1e-05
    %v856 = vadd.f32 %v824, 1e-05
    %v857 = vadd.f32 %v825, 1e-05
    %v858 = vadd.f32 %v826, 1e-05
    %v859 = vadd.f32 %v827, 1e-05
    %v860 = vadd.f32 %v828, 1e-05
    %v861 = vadd.f32 %v829, 1e-05
    %v862 = vadd.f32 %v830, 1e-05
    %v863 = vadd.f32 %v831, 1e-05
    %v864 = vrsqrt.pop %v848
    %v865 = vrsqrt.pop %v849
    %v866 = vrsqrt.pop %v850
    %v867 = vrsqrt.pop %v851
    %v868 = vrsqrt.pop %v852
    %v869 = vrsqrt.pop %v853
    %v870 = vrsqrt.pop %v854
    %v871 = vrsqrt.pop %v855
    %v872 = vrsqrt.pop %v856
    %v873 = vrsqrt.pop %v857
    %v874 = vrsqrt.pop %v858
    %v875 = vrsqrt.pop %v859
    %v876 = vrsqrt.pop %v860
    %v877 = vrsqrt.pop %v861
    %v878 = vrsqrt.pop %v862
    %v879 = vrsqrt.pop %v863
    %v880 = vmul.f32 %v832, %v864
    %v881 = vmul.f32 %v833, %v865
    %v882 = vmul.f32 %v834, %v866
    %v883 = vmul.f32 %v835, %v867
    %v884 = vmul.f32 %v836, %v868
    %v885 = vmul.f32 %v837, %v869
    %v886 = vmul.f32 %v838, %v870
    %v887 = vmul.f32 %v839, %v871
    %v888 = vmul.f32 %v840, %v872
    %v889 = vmul.f32 %v841, %v873
    %v890 = vmul.f32 %v842, %v874
    %v891 = vmul.f32 %v843, %v875
    %v892 = vmul.f32 %v844, %v876
    %v893 = vmul.f32 %v845, %v877
    %v894 = vmul.f32 %v846, %v878
    %v895 = vmul.f32 %v847, %v879
    %v896 = vlaneseq
    %v897 = vshrl.u32 %v896, 7
    %v898 = vsub.s32 0, %v897
    %v899 = vrot.slane %v670, %v898
    %v900 = vmul.f32 %v880, %v899
    %v901 = vmul.f32 %v881, %v899
    %v902 = vmul.f32 %v882, %v899
    %v903 = vmul.f32 %v883, %v899
    %v904 = vmul.f32 %v884, %v899
    %v905 = vmul.f32 %v885, %v899
    %v906 = vmul.f32 %v886, %v899
    %v907 = vmul.f32 %v887, %v899
    %v908 = vmul.f32 %v888, %v899
    %v909 = vmul.f32 %v889, %v899
    %v910 = vmul.f32 %v890, %v899
    %v911 = vmul.f32 %v891, %v899
    %v912 = vmul.f32 %v892, %v899
    %v913 = vmul.f32 %v893, %v899
    %v914 = vmul.f32 %v894, %v899
    %v915 = vmul.f32 %v895, %v899
    %v916 = vlaneseq
    %v917 = vshrl.u32 %v916, 7
    %v918 = vsub.s32 0, %v917
    %v919 = vrot.slane %v671, %v918
    %v920 = vadd.f32 %v900, %v919
    %v921 = vadd.f32 %v901, %v919
    %v922 = vadd.f32 %v902, %v919
    %v923 = vadd.f32 %v903, %v919
    %v924 = vadd.f32 %v904, %v919
    %v925 = vadd.f32 %v905, %v919
    %v926 = vadd.f32 %v906, %v919
    %v927 = vadd.f32 %v907, %v919
    %v928 = vadd.f32 %v908, %v919
    %v929 = vadd.f32 %v909, %v919
    %v930 = vadd.f32 %v910, %v919
    %v931 = vadd.f32 %v911, %v919
    %v932 = vadd.f32 %v912, %v919
    %v933 = vadd.f32 %v913, %v919
    %v934 = vadd.f32 %v914, %v919
    %v935 = vadd.f32 %v915, %v919
    %v936 = vmax.f32 %v920, 0.0
    %v937 = vmax.f32 %v921, 0.0
    %v938 = vmax.f32 %v922, 0.0
    %v939 = vmax.f32 %v923, 0.0
    %v940 = vmax.f32 %v924, 0.0
    %v941 = vmax.f32 %v925, 0.0
    %v942 = vmax.f32 %v926, 0.0
    %v943 = vmax.f32 %v927, 0.0
    %v944 = vmax.f32 %v928, 0.0
    %v945 = vmax.f32 %v929, 0.0
    %v946 = vmax.f32 %v930, 0.0
    %v947 = vmax.f32 %v931, 0.0
    %v948 = vmax.f32 %v932, 0.0
    %v949 = vmax.f32 %v933, 0.0
    %v950 = vmax.f32 %v934, 0.0
    %v951 = vmax.f32 %v935, 0.0
    %v952 = vld [vmem:[#allocation5 + $0x110] sm:$0xff]
    %v953 = vld [vmem:[#allocation5 + $0x118] sm:$0xff]
    %v954 = vld [vmem:[#allocation5 + $0x120] sm:$0xff]
    %v955 = vld [vmem:[#allocation5 + $0x128] sm:$0xff]
    %v956 = vld [vmem:[#allocation5 + $0x130] sm:$0xff]
    %v957 = vld [vmem:[#allocation5 + $0x138] sm:$0xff]
    %v958 = vld [vmem:[#allocation5 + $0x140] sm:$0xff]
    %v959 = vld [vmem:[#allocation5 + $0x148] sm:$0xff]
    %v960 = vld [vmem:[#allocation5 + $0x150] sm:$0xff]
    %v961 = vld [vmem:[#allocation5 + $0x158] sm:$0xff]
    %v962 = vld [vmem:[#allocation5 + $0x160] sm:$0xff]
    %v963 = vld [vmem:[#allocation5 + $0x168] sm:$0xff]
    %v964 = vld [vmem:[#allocation5 + $0x170] sm:$0xff]
    %v965 = vld [vmem:[#allocation5 + $0x178] sm:$0xff]
    %v966 = vld [vmem:[#allocation5 + $0x180] sm:$0xff]
    %v967 = vld [vmem:[#allocation5 + $0x188] sm:$0xff]
    %v968 = vld [vmem:[#allocation5 + $0x190] sm:$0x1]
    %v969 = vlaneseq
    %v970 = vshrl.u32 %v969, 7
    %v971 = vsub.s32 0, %v970
    %v972 = vrot.slane %v968, %v971
    %973 = vmatprep.subr.mxu0 0.0
    %974 = vmatpush1.msra.mxu0 %v952
    %975 = vmatprep.subr.mxu0 0.0
    %976 = vmatpush1.msra.mxu0 %v953
    %977 = vmatprep.subr.mxu0 0.0
    %978 = vmatpush1.msra.mxu0 %v954
    %979 = vmatprep.subr.mxu0 0.0
    %980 = vmatpush1.msra.mxu0 %v955
    %981 = vmatprep.subr.mxu0 0.0
    %982 = vmatpush1.msra.mxu0 %v956
    %983 = vmatprep.subr.mxu0 0.0
    %984 = vmatpush1.msra.mxu0 %v957
    %985 = vmatprep.subr.mxu0 0.0
    %986 = vmatpush1.msra.mxu0 %v958
    %987 = vmatprep.subr.mxu0 0.0
    %988 = vmatpush1.msra.mxu0 %v959
    %989 = vmatprep.subr.mxu0 0.0
    %990 = vmatpush1.msra.mxu0 %v960
    %991 = vmatprep.subr.mxu0 0.0
    %992 = vmatpush1.msra.mxu0 %v961
    %993 = vmatprep.subr.mxu0 0.0
    %994 = vmatpush1.msra.mxu0 %v962
    %995 = vmatprep.subr.mxu0 0.0
    %996 = vmatpush1.msra.mxu0 %v963
    %997 = vmatprep.subr.mxu0 0.0
    %998 = vmatpush1.msra.mxu0 %v964
    %999 = vmatprep.subr.mxu0 0.0
    %1000 = vmatpush1.msra.mxu0 %v965
    %1001 = vmatprep.subr.mxu0 0.0
    %1002 = vmatpush1.msra.mxu0 %v966
    %1003 = vmatprep.subr.mxu0 0.0
    %1004 = vmatpush1.msra.mxu0 %v967
    %1005 = vmatprep.subr.mxu0 0.0
    %1006 = vmatpush1.msra.mxu0 0.0
    %1007 = vmatprep.subr.mxu0 0.0
    %1008 = vmatpush1.msra.mxu0 0.0
    %1009 = vmatprep.subr.mxu0 0.0
    %1010 = vmatpush1.msra.mxu0 0.0
    %1011 = vmatprep.subr.mxu0 0.0
    %1012 = vmatpush1.msra.mxu0 0.0
    %1013 = vmatprep.subr.mxu0 0.0
    %1014 = vmatpush1.msra.mxu0 0.0
    %1015 = vmatprep.subr.mxu0 0.0
    %1016 = vmatpush1.msra.mxu0 0.0
    %1017 = vmatprep.subr.mxu0 0.0
    %1018 = vmatpush1.msra.mxu0 0.0
    %1019 = vmatprep.subr.mxu0 0.0
    %1020 = vmatpush1.msra.mxu0 0.0
    %1021 = vmatprep.subr.mxu0 0.0
    %1022 = vmatpush1.msra.mxu0 0.0
    %1023 = vmatprep.subr.mxu0 0.0
    %1024 = vmatpush1.msra.mxu0 0.0
    %1025 = vmatprep.subr.mxu0 0.0
    %1026 = vmatpush1.msra.mxu0 0.0
    %1027 = vmatprep.subr.mxu0 0.0
    %1028 = vmatpush1.msra.mxu0 0.0
    %1029 = vmatprep.subr.mxu0 0.0
    %1030 = vmatpush1.msra.mxu0 0.0
    %1031 = vmatprep.subr.mxu0 0.0
    %1032 = vmatpush1.msra.mxu0 0.0
    %1033 = vmatprep.subr.mxu0 0.0
    %1034 = vmatpush1.msra.mxu0 0.0
    %1035 = vmatprep.subr.mxu0 0.0
    %1036 = vmatpush1.msra.mxu0 0.0
    %1037 = vmatprep.mubr.f32.mxu0 0.0
    %1038 = vmatmul.mubr.f32.gmra.mrb[0].mxu0 %v936
    %v1039 = vpop.f32.mrb[0].mxu0
    %v1040 = vadd.f32 %v972, %v1039
    %v1041 = vpop.f32.mrb[0].mxu0
    %1042 = vmatprep.mubr.f32.mxu0 0.0
    %1043 = vmatmul.mubr.f32.gmra.mrb[0].mxu0 %v937
    %v1044 = vpop.f32.mrb[0].mxu0
    %v1045 = vadd.f32 %v972, %v1044
    %v1046 = vpop.f32.mrb[0].mxu0
    %1047 = vmatprep.mubr.f32.mxu0 0.0
    %1048 = vmatmul.mubr.f32.gmra.mrb[0].mxu0 %v938
    %v1049 = vpop.f32.mrb[0].mxu0
    %v1050 = vadd.f32 %v972, %v1049
    %v1051 = vpop.f32.mrb[0].mxu0
    %1052 = vmatprep.mubr.f32.mxu0 0.0
    %1053 = vmatmul.mubr.f32.gmra.mrb[0].mxu0 %v939
    %v1054 = vpop.f32.mrb[0].mxu0
    %v1055 = vadd.f32 %v972, %v1054
    %v1056 = vpop.f32.mrb[0].mxu0
    %1057 = vmatprep.mubr.f32.mxu0 0.0
    %1058 = vmatmul.mubr.f32.gmra.mrb[0].mxu0 %v940
    %v1059 = vpop.f32.mrb[0].mxu0
    %v1060 = vadd.f32 %v972, %v1059
    %v1061 = vpop.f32.mrb[0].mxu0
    %1062 = vmatprep.mubr.f32.mxu0 0.0
    %1063 = vmatmul.mubr.f32.gmra.mrb[0].mxu0 %v941
    %v1064 = vpop.f32.mrb[0].mxu0
    %v1065 = vadd.f32 %v972, %v1064
    %v1066 = vpop.f32.mrb[0].mxu0
    %1067 = vmatprep.mubr.f32.mxu0 0.0
    %1068 = vmatmul.mubr.f32.gmra.mrb[0].mxu0 %v942
    %v1069 = vpop.f32.mrb[0].mxu0
    %v1070 = vadd.f32 %v972, %v1069
    %v1071 = vpop.f32.mrb[0].mxu0
    %1072 = vmatprep.mubr.f32.mxu0 0.0
    %1073 = vmatmul.mubr.f32.gmra.mrb[0].mxu0 %v943
    %v1074 = vpop.f32.mrb[0].mxu0
    %v1075 = vadd.f32 %v972, %v1074
    %v1076 = vpop.f32.mrb[0].mxu0
    %1077 = vmatprep.mubr.f32.mxu0 0.0
    %1078 = vmatmul.mubr.f32.gmra.mrb[0].mxu0 %v944
    %v1079 = vpop.f32.mrb[0].mxu0
    %v1080 = vadd.f32 %v972, %v1079
    %v1081 = vpop.f32.mrb[0].mxu0
    %1082 = vmatprep.mubr.f32.mxu0 0.0
    %1083 = vmatmul.mubr.f32.gmra.mrb[0].mxu0 %v945
    %v1084 = vpop.f32.mrb[0].mxu0
    %v1085 = vadd.f32 %v972, %v1084
    %v1086 = vpop.f32.mrb[0].mxu0
    %1087 = vmatprep.mubr.f32.mxu0 0.0
    %1088 = vmatmul.mubr.f32.gmra.mrb[0].mxu0 %v946
    %v1089 = vpop.f32.mrb[0].mxu0
    %v1090 = vadd.f32 %v972, %v1089
    %v1091 = vpop.f32.mrb[0].mxu0
    %1092 = vmatprep.mubr.f32.mxu0 0.0
    %1093 = vmatmul.mubr.f32.gmra.mrb[0].mxu0 %v947
    %v1094 = vpop.f32.mrb[0].mxu0
    %v1095 = vadd.f32 %v972, %v1094
    %v1096 = vpop.f32.mrb[0].mxu0
    %1097 = vmatprep.mubr.f32.mxu0 0.0
    %1098 = vmatmul.mubr.f32.gmra.mrb[0].mxu0 %v948
    %v1099 = vpop.f32.mrb[0].mxu0
    %v1100 = vadd.f32 %v972, %v1099
    %v1101 = vpop.f32.mrb[0].mxu0
    %1102 = vmatprep.mubr.f32.mxu0 0.0
    %1103 = vmatmul.mubr.f32.gmra.mrb[0].mxu0 %v949
    %v1104 = vpop.f32.mrb[0].mxu0
    %v1105 = vadd.f32 %v972, %v1104
    %v1106 = vpop.f32.mrb[0].mxu0
    %1107 = vmatprep.mubr.f32.mxu0 0.0
    %1108 = vmatmul.mubr.f32.gmra.mrb[0].mxu0 %v950
    %v1109 = vpop.f32.mrb[0].mxu0
    %v1110 = vadd.f32 %v972, %v1109
    %v1111 = vpop.f32.mrb[0].mxu0
    %1112 = vmatprep.mubr.f32.mxu0 0.0
    %1113 = vmatmul.mubr.f32.gmra.mrb[0].mxu0 %v951
    %v1114 = vpop.f32.mrb[0].mxu0
    %v1115 = vadd.f32 %v972, %v1114
    %v1116 = vpop.f32.mrb[0].mxu0
    %1117 = vdwg.mxu0
    %v1118 = vmul.f32 %v1040, %v1040
    %v1119 = vmul.f32 %v1045, %v1045
    %v1120 = vmul.f32 %v1050, %v1050
    %v1121 = vmul.f32 %v1055, %v1055
    %v1122 = vmul.f32 %v1060, %v1060
    %v1123 = vmul.f32 %v1065, %v1065
    %v1124 = vmul.f32 %v1070, %v1070
    %v1125 = vmul.f32 %v1075, %v1075
    %v1126 = vmul.f32 %v1080, %v1080
    %v1127 = vmul.f32 %v1085, %v1085
    %v1128 = vmul.f32 %v1090, %v1090
    %v1129 = vmul.f32 %v1095, %v1095
    %v1130 = vmul.f32 %v1100, %v1100
    %v1131 = vmul.f32 %v1105, %v1105
    %v1132 = vmul.f32 %v1110, %v1110
    %v1133 = vmul.f32 %v1115, %v1115
    %1134 = vadd.xlane.f32.xlu0 %v1118
    %v1135 = vpop.xlane.xlu0 %1134
    %1136 = vadd.xlane.f32.xlu0 %v1119
    %v1137 = vpop.xlane.xlu0 %1136
    %1138 = vadd.xlane.f32.xlu0 %v1120
    %v1139 = vpop.xlane.xlu0 %1138
    %1140 = vadd.xlane.f32.xlu0 %v1121
    %v1141 = vpop.xlane.xlu0 %1140
    %1142 = vadd.xlane.f32.xlu0 %v1122
    %v1143 = vpop.xlane.xlu0 %1142
    %1144 = vadd.xlane.f32.xlu0 %v1123
    %v1145 = vpop.xlane.xlu0 %1144
    %1146 = vadd.xlane.f32.xlu0 %v1124
    %v1147 = vpop.xlane.xlu0 %1146
    %1148 = vadd.xlane.f32.xlu0 %v1125
    %v1149 = vpop.xlane.xlu0 %1148
    %1150 = vadd.xlane.f32.xlu0 %v1126
    %v1151 = vpop.xlane.xlu0 %1150
    %1152 = vadd.xlane.f32.xlu0 %v1127
    %v1153 = vpop.xlane.xlu0 %1152
    %1154 = vadd.xlane.f32.xlu0 %v1128
    %v1155 = vpop.xlane.xlu0 %1154
    %1156 = vadd.xlane.f32.xlu0 %v1129
    %v1157 = vpop.xlane.xlu0 %1156
    %1158 = vadd.xlane.f32.xlu0 %v1130
    %v1159 = vpop.xlane.xlu0 %1158
    %1160 = vadd.xlane.f32.xlu0 %v1131
    %v1161 = vpop.xlane.xlu0 %1160
    %1162 = vadd.xlane.f32.xlu0 %v1132
    %v1163 = vpop.xlane.xlu0 %1162
    %1164 = vadd.xlane.f32.xlu0 %v1133
    %v1165 = vpop.xlane.xlu0 %1164
    %v1166 = vmax.f32 %v1135, 1e-24
    %v1167 = vmax.f32 %v1137, 1e-24
    %v1168 = vmax.f32 %v1139, 1e-24
    %v1169 = vmax.f32 %v1141, 1e-24
    %v1170 = vmax.f32 %v1143, 1e-24
    %v1171 = vmax.f32 %v1145, 1e-24
    %v1172 = vmax.f32 %v1147, 1e-24
    %v1173 = vmax.f32 %v1149, 1e-24
    %v1174 = vmax.f32 %v1151, 1e-24
    %v1175 = vmax.f32 %v1153, 1e-24
    %v1176 = vmax.f32 %v1155, 1e-24
    %v1177 = vmax.f32 %v1157, 1e-24
    %v1178 = vmax.f32 %v1159, 1e-24
    %v1179 = vmax.f32 %v1161, 1e-24
    %v1180 = vmax.f32 %v1163, 1e-24
    %v1181 = vmax.f32 %v1165, 1e-24
    %v1182 = vrsqrt.pop %v1166
    %v1183 = vrsqrt.pop %v1167
    %v1184 = vrsqrt.pop %v1168
    %v1185 = vrsqrt.pop %v1169
    %v1186 = vrsqrt.pop %v1170
    %v1187 = vrsqrt.pop %v1171
    %v1188 = vrsqrt.pop %v1172
    %v1189 = vrsqrt.pop %v1173
    %v1190 = vrsqrt.pop %v1174
    %v1191 = vrsqrt.pop %v1175
    %v1192 = vrsqrt.pop %v1176
    %v1193 = vrsqrt.pop %v1177
    %v1194 = vrsqrt.pop %v1178
    %v1195 = vrsqrt.pop %v1179
    %v1196 = vrsqrt.pop %v1180
    %v1197 = vrsqrt.pop %v1181
    %v1198 = vmul.f32 %v1040, %v1182
    %v1199 = vmul.f32 %v1045, %v1183
    %v1200 = vmul.f32 %v1050, %v1184
    %v1201 = vmul.f32 %v1055, %v1185
    %v1202 = vmul.f32 %v1060, %v1186
    %v1203 = vmul.f32 %v1065, %v1187
    %v1204 = vmul.f32 %v1070, %v1188
    %v1205 = vmul.f32 %v1075, %v1189
    %v1206 = vmul.f32 %v1080, %v1190
    %v1207 = vmul.f32 %v1085, %v1191
    %v1208 = vmul.f32 %v1090, %v1192
    %v1209 = vmul.f32 %v1095, %v1193
    %v1210 = vmul.f32 %v1100, %v1194
    %v1211 = vmul.f32 %v1105, %v1195
    %v1212 = vmul.f32 %v1110, %v1196
    %v1213 = vmul.f32 %v1115, %v1197
    %1214 = vst [vmem:[#allocation7] sm:$0xff] %v1198
    %1215 = vst [vmem:[#allocation7 + $0x8] sm:$0xff] %v1199
    %1216 = vst [vmem:[#allocation7 + $0x10] sm:$0xff] %v1200
    %1217 = vst [vmem:[#allocation7 + $0x18] sm:$0xff] %v1201
    %1218 = vst [vmem:[#allocation7 + $0x20] sm:$0xff] %v1202
    %1219 = vst [vmem:[#allocation7 + $0x28] sm:$0xff] %v1203
    %1220 = vst [vmem:[#allocation7 + $0x30] sm:$0xff] %v1204
    %1221 = vst [vmem:[#allocation7 + $0x38] sm:$0xff] %v1205
    %1222 = vst [vmem:[#allocation7 + $0x40] sm:$0xff] %v1206
    %1223 = vst [vmem:[#allocation7 + $0x48] sm:$0xff] %v1207
    %1224 = vst [vmem:[#allocation7 + $0x50] sm:$0xff] %v1208
    %1225 = vst [vmem:[#allocation7 + $0x58] sm:$0xff] %v1209
    %1226 = vst [vmem:[#allocation7 + $0x60] sm:$0xff] %v1210
    %1227 = vst [vmem:[#allocation7 + $0x68] sm:$0xff] %v1211
    %1228 = vst [vmem:[#allocation7 + $0x70] sm:$0xff] %v1212
    %1229 = vst [vmem:[#allocation7 + $0x78] sm:$0xff] %v1213
    // Predicated region
    $region18: #{tpu_custom_call.1} parent=1 // pred_check
      _
    $region19: #{tpu_custom_call.1} parent=1 // pred_check_branch
      %1231 = sbr.rel (0) target = $region21
    $region20: #{tpu_custom_call.1} parent=1 // pred_region
      %s1233 = ssub.s32 2048, 2048
      %1234 = vsyncadd [#allocation4], %s1233
      %s1235 = sshll.u32 [#allocation7], 4
      %s1236 = int_to_ptr.vmem [resolvable:$true] %s1235
      %1241 = dma.vmem_to_hbm [thread:$0]  %s1236, 2048, %s2, [#allocation4], 128, 128, 8
    $region21: #{tpu_custom_call.1} parent=1 // pred_fallthru
      _
    // Predicated region
    $region22: #{tpu_custom_call.1} parent=1 // pred_check
      _
    $region23: #{tpu_custom_call.1} parent=1 // pred_check_branch
      %1243 = sbr.rel (0) target = $region25
    $region24: #{tpu_custom_call.1} parent=1 // pred_region
      %1244 = dma.done [#allocation4], 2048
    $region25: #{tpu_custom_call.1} parent=1 // pred_fallthru
      _
    %1245 = vsyncpa [#allocation3], 1
    %1246 = vsyncpa [#allocation6], 1
    %1247 = vsyncpa [#allocation4], 1

</llo_original>
